<compile_context>
chip_gen: v7x
topology: tpu7x:2x2x1
jax: 0.10.0
libtpu: 0.0.40
codegen_flags: <defaults>
</compile_context>

<pallas_src>
import jax
import jax.numpy as jnp
from jax.experimental import pallas as pl
from jax.experimental.pallas import tpu as pltpu


def lstm_kernel(x_ref, w_ih_ref, w_hh_ref, b_ref, w_out_ref, b_out_ref,
                o_ref, pre_sc):
    B = o_ref.shape[0]              # batch
    H = w_hh_ref.shape[0]           # hidden
    TB = pre_sc.shape[0]            # seq * batch
    T = TB // B                     # seq (static)
    G = 4 * H

    # ---- prologue: one MXU matmul covers the x-projection for all timesteps.
    pre_sc[...] = (jnp.dot(x_ref[...], w_ih_ref[...],
                           preferred_element_type=jnp.float32)
                   + b_ref[...])                          # (T*B, 4H)

    # Hoisted out of the serial loop: recurrent weights + static lane mask.
    w_hh = w_hh_ref[...]                                  # (H, 4H)
    lane = jax.lax.broadcasted_iota(jnp.int32, (B, G), 1)
    tanh_lanes = lane >= 3 * H                            # gate columns are [i, f, o, g]

    def step(t, carry):
        h, c = carry
        row = pl.multiple_of(t * B, B)                    # sublane-aligned start
        gates = pre_sc[pl.ds(row, B), :] + jnp.dot(
            h, w_hh, preferred_element_type=jnp.float32)  # (B, 4H)

        # Merged activations: 2 full-width EUP passes + 1 select, instead of four
        # 32-lane extractions followed by four transcendentals.
        act = jnp.where(tanh_lanes, jnp.tanh(gates), jax.nn.sigmoid(gates))

        i_g = act[:, 0 * H:1 * H]
        f_g = act[:, 1 * H:2 * H]
        o_g = act[:, 2 * H:3 * H]
        g_g = act[:, 3 * H:4 * H]

        c_new = f_g * c + i_g * g_g
        h_new = o_g * jnp.tanh(c_new)
        return h_new, c_new

    h0 = jnp.zeros((B, H), jnp.float32)
    c0 = jnp.zeros((B, H), jnp.float32)
    h, _ = jax.lax.fori_loop(0, T, step, (h0, c0), unroll=True)

    # ---- epilogue: output head + log_softmax, lane-dense (B, 128) store.
    logits = (jnp.dot(h, w_out_ref[...], preferred_element_type=jnp.float32)
              + b_out_ref[...])                           # (B, pad); padded cols ~ finfo.min/2
    m = jnp.max(logits, axis=-1, keepdims=True)
    lse = jnp.log(jnp.sum(jnp.exp(logits - m), axis=-1, keepdims=True)) + m
    o_ref[...] = (logits - lse).astype(o_ref.dtype)


def _permute_gate_cols(a, H):
    """Reorder 4H gate columns from PyTorch [i, f, g, o] to kernel [i, f, o, g]."""
    return jnp.concatenate(
        [a[:, 0:2 * H], a[:, 3 * H:4 * H], a[:, 2 * H:3 * H]], axis=1)


def lstm_net_forward(sentences, params, *, seq_len, batch_size, embedding_dim,
                     hidden_dim, target_size):
    """sentences: (batch, seq, emb) float32 — reinterpreted like torch .view(seq, batch, emb).

    Note: this is a raw buffer reinterpretation (exactly what the PyTorch module does),
    not a transpose; it matches the JAX reference below.
    """
    w_ih, w_hh, b_ih, b_hh, w_out, b_out = params

    TB = seq_len * batch_size
    G = 4 * hidden_dim

    # torch: sentences.view(seq, batch, emb) — flattening keeps exactly that row order.
    x_flat = jnp.reshape(sentences, (TB, embedding_dim))

    # Pre-transpose weights, fold both biases, and permute gate columns to [i, f, o, g]
    # so the kernel can run one sigmoid over the first 3H lanes and one tanh over the last H.
    w_ih_t = _permute_gate_cols(w_ih.T, hidden_dim)               # (E, 4H)
    w_hh_t = _permute_gate_cols(w_hh.T, hidden_dim)               # (H, 4H)
    b = _permute_gate_cols((b_ih + b_hh).reshape(1, G), hidden_dim)  # (1, 4H)

    # Lane-dense output head: pad target dim to a multiple of 128 lanes.
    # Padding columns: weight 0, dtype-relative very-negative bias -> exp contribution 0.
    pad_to = ((target_size + 127) // 128) * 128
    neg_big = jnp.finfo(jnp.float32).min / 2
    w_out_pad = jnp.zeros((hidden_dim, pad_to), jnp.float32)
    w_out_pad = w_out_pad.at[:, :target_size].set(w_out.T)
    b_out_pad = jnp.full((1, pad_to), neg_big, jnp.float32)
    b_out_pad = b_out_pad.at[0, :target_size].set(b_out)

    out_pad = pl.pallas_call(
        lstm_kernel,
        out_shape=jax.ShapeDtypeStruct((batch_size, pad_to), jnp.float32),
        grid_spec=pltpu.PrefetchScalarGridSpec(
            num_scalar_prefetch=0,
            grid=(1,),                                            # single grid step
            in_specs=[
                pl.BlockSpec((TB, embedding_dim), lambda i: (0, 0)),     # x (time-major, flat)
                pl.BlockSpec((embedding_dim, G), lambda i: (0, 0)),      # W_ih^T (gate-permuted)
                pl.BlockSpec((hidden_dim, G), lambda i: (0, 0)),         # W_hh^T (gate-permuted)
                pl.BlockSpec((1, G), lambda i: (0, 0)),                  # fused bias
                pl.BlockSpec((hidden_dim, pad_to), lambda i: (0, 0)),    # W_out^T (padded)
                pl.BlockSpec((1, pad_to), lambda i: (0, 0)),             # b_out (padded)
            ],
            out_specs=pl.BlockSpec((batch_size, pad_to), lambda i: (0, 0)),
            scratch_shapes=[
                pltpu.VMEM((TB, G), jnp.float32),   # precomputed x-projection, all timesteps
            ],
        ),
        compiler_params=pltpu.CompilerParams(
            dimension_semantics=("arbitrary",)),
    )(x_flat, w_ih_t, w_hh_t, b, w_out_pad, b_out_pad)

    return out_pad[:, :target_size]


def xavier_normal(key, shape):
    fan_out, fan_in = shape
    std = jnp.sqrt(2.0 / (fan_in + fan_out))
    return std * jax.random.normal(key, shape, dtype=jnp.float32)


def init_params(key, embedding_dim, hidden_dim, target_size):
    k1, k2, k3 = jax.random.split(key, 3)
    w_ih = xavier_normal(k1, (4 * hidden_dim, embedding_dim))   # lstm.weight_ih_l0
    w_hh = xavier_normal(k2, (4 * hidden_dim, hidden_dim))      # lstm.weight_hh_l0
    b_ih = jnp.zeros((4 * hidden_dim,), jnp.float32)            # 1-D params -> constant 0
    b_hh = jnp.zeros((4 * hidden_dim,), jnp.float32)
    w_out = xavier_normal(k3, (target_size, hidden_dim))        # hidden_to_target.weight
    b_out = jnp.zeros((target_size,), jnp.float32)
    return (w_ih, w_hh, b_ih, b_hh, w_out, b_out)


def reference_forward(sentences, params, *, seq_len, batch_size, embedding_dim,
                      hidden_dim, target_size):
    """Pure-JAX reference of the PyTorch forward (fresh zero state), for verification."""
    w_ih, w_hh, b_ih, b_hh, w_out, b_out = params
    x = jnp.reshape(sentences, (seq_len, batch_size, embedding_dim))
    h = jnp.zeros((batch_size, hidden_dim), jnp.float32)
    c = jnp.zeros((batch_size, hidden_dim), jnp.float32)

    def step(carry, x_t):
        h, c = carry
        gates = x_t @ w_ih.T + h @ w_hh.T + b_ih + b_hh
        i = jax.nn.sigmoid(gates[:, 0 * hidden_dim:1 * hidden_dim])
        f = jax.nn.sigmoid(gates[:, 1 * hidden_dim:2 * hidden_dim])
        g = jnp.tanh(gates[:, 2 * hidden_dim:3 * hidden_dim])
        o = jax.nn.sigmoid(gates[:, 3 * hidden_dim:4 * hidden_dim])
        c = f * c + i * g
        h = o * jnp.tanh(c)
        return (h, c), h

    (h, c), _ = jax.lax.scan(step, (h, c), x)
    logits = h @ w_out.T + b_out
    return jax.nn.log_softmax(logits, axis=-1)


if __name__ == "__main__":
    # Small shapes consistent with the module's forward.
    batch_size = 8
    seq_len = 8
    embedding_dim = 16
    hidden_dim = 32
    target_size = 4

    key = jax.random.PRNGKey(0)
    k_param, k_data = jax.random.split(key)
    params = init_params(k_param, embedding_dim, hidden_dim, target_size)

    sentences = jax.random.normal(
        k_data, (batch_size, seq_len, embedding_dim), dtype=jnp.float32)

    out = lstm_net_forward(
        sentences, params,
        seq_len=seq_len, batch_size=batch_size, embedding_dim=embedding_dim,
        hidden_dim=hidden_dim, target_size=target_size)
    out = jax.block_until_ready(out)

    ref = reference_forward(
        sentences, params,
        seq_len=seq_len, batch_size=batch_size, embedding_dim=embedding_dim,
        hidden_dim=hidden_dim, target_size=target_size)
    ref = jax.block_until_ready(ref)

    assert out.shape == (batch_size, target_size)
    assert jnp.allclose(out, ref, atol=1e-5, rtol=1e-5), "mismatch vs JAX reference"
    print("KERNEL_OK")
</pallas_src>

<mosaic_0001>
module attributes {stable_mosaic.version = 11 : i64} {
  func.func @lstm_kernel(%arg0: i32, %arg1: memref<64x16xf32, #tpu.memory_space<vmem>>, %arg2: memref<16x128xf32, #tpu.memory_space<vmem>>, %arg3: memref<32x128xf32, #tpu.memory_space<vmem>>, %arg4: memref<1x128xf32, #tpu.memory_space<vmem>>, %arg5: memref<32x128xf32, #tpu.memory_space<vmem>>, %arg6: memref<1x128xf32, #tpu.memory_space<vmem>>, %arg7: memref<8x128xf32, #tpu.memory_space<vmem>>, %arg8: memref<64x128xf32, #tpu.memory_space<vmem>>) attributes {dimension_semantics = [#tpu.dimension_semantics<arbitrary>], iteration_bounds = array<i64: 1>, scalar_prefetch = 0 : i64, scratch_operands = 1 : i64, tpu.core_type = #tpu.core_type<tc>, window_params = [{pipeline_mode = #tpu.pipeline_mode<synchronous>, transform_indices = @transform_0, window_bounds = array<i64: 64, 16>}, {pipeline_mode = #tpu.pipeline_mode<synchronous>, transform_indices = @transform_1, window_bounds = array<i64: 16, 128>}, {pipeline_mode = #tpu.pipeline_mode<synchronous>, transform_indices = @transform_2, window_bounds = array<i64: 32, 128>}, {pipeline_mode = #tpu.pipeline_mode<synchronous>, transform_indices = @transform_3, window_bounds = array<i64: 1, 128>}, {pipeline_mode = #tpu.pipeline_mode<synchronous>, transform_indices = @transform_4, window_bounds = array<i64: 32, 128>}, {pipeline_mode = #tpu.pipeline_mode<synchronous>, transform_indices = @transform_5, window_bounds = array<i64: 1, 128>}, {pipeline_mode = #tpu.pipeline_mode<synchronous>, transform_indices = @transform_6, window_bounds = array<i64: 8, 128>}]} {
    %c0 = arith.constant 0 : index
    %c0_0 = arith.constant 0 : index
    %0 = vector.load %arg1[%c0, %c0_0] : memref<64x16xf32, #tpu.memory_space<vmem>>, vector<64x16xf32>
    %c0_1 = arith.constant 0 : index
    %c0_2 = arith.constant 0 : index
    %1 = vector.load %arg2[%c0_1, %c0_2] : memref<16x128xf32, #tpu.memory_space<vmem>>, vector<16x128xf32>
    %cst = arith.constant dense<0.000000e+00> : vector<64x128xf32>
    %2 = tpu.matmul %0, %1, %cst {dimension_numbers = #tpu.dot_dimension_numbers<[1], [0], [0], [1], [0, 0, 1, 1], [], []>} : vector<64x16xf32>, vector<16x128xf32>, vector<64x128xf32> -> vector<64x128xf32>
    %c0_3 = arith.constant 0 : index
    %c0_4 = arith.constant 0 : index
    %3 = vector.load %arg4[%c0_3, %c0_4] : memref<1x128xf32, #tpu.memory_space<vmem>>, vector<1x128xf32>
    %4 = vector.broadcast %3 : vector<1x128xf32> to vector<64x128xf32>
    %5 = arith.addf %2, %4 : vector<64x128xf32>
    %c0_5 = arith.constant 0 : index
    %c0_6 = arith.constant 0 : index
    %6 = vector.load %arg8[%c0_5, %c0_6] : memref<64x128xf32, #tpu.memory_space<vmem>>, vector<64x128xf32>
    tpu.vector_store %arg8[%c0_5, %c0_6], %5 {strides = array<i32>} : memref<64x128xf32, #tpu.memory_space<vmem>>, vector<64x128xf32>,
    %c0_7 = arith.constant 0 : index
    %c0_8 = arith.constant 0 : index
    %7 = vector.load %arg3[%c0_7, %c0_8] : memref<32x128xf32, #tpu.memory_space<vmem>>, vector<32x128xf32>
    %8 = tpu.iota {dimensions = array<i32: 1>} : vector<8x128xi32>
    %c96_i32 = arith.constant 96 : i32
    %9 = vector.broadcast %c96_i32 : i32 to vector<8x128xi32>
    %10 = arith.cmpi sge, %8, %9 : vector<8x128xi32>
    %cst_9 = arith.constant 0.000000e+00 : f32
    %11 = vector.broadcast %cst_9 : f32 to vector<8x32xf32>
    %cst_10 = arith.constant 0.000000e+00 : f32
    %12 = vector.broadcast %cst_10 : f32 to vector<8x32xf32>
    %c0_i32 = arith.constant 0 : i32
    %c8_i32 = arith.constant 8 : i32
    %13 = arith.muli %c0_i32, %c8_i32 : i32
    %14 = tpu.assume_multiple %13, 8 : i32
    %15 = arith.index_cast %14 : i32 to index
    %c0_11 = arith.constant 0 : index
    %16 = vector.load %arg8[%15, %c0_11] : memref<64x128xf32, #tpu.memory_space<vmem>>, vector<8x128xf32>
    %cst_12 = arith.constant dense<0.000000e+00> : vector<8x128xf32>
    %17 = tpu.matmul %11, %7, %cst_12 {dimension_numbers = #tpu.dot_dimension_numbers<[1], [0], [0], [1], [0, 0, 1, 1], [], []>} : vector<8x32xf32>, vector<32x128xf32>, vector<8x128xf32> -> vector<8x128xf32>
    %18 = arith.addf %16, %17 : vector<8x128xf32>
    %19 = math.tanh %18 : vector<8x128xf32>
    %20 = arith.negf %18 : vector<8x128xf32>
    %21 = math.exp %20 : vector<8x128xf32>
    %cst_13 = arith.constant 1.000000e+00 : f32
    %22 = vector.broadcast %cst_13 : f32 to vector<8x128xf32>
    %23 = arith.addf %22, %21 : vector<8x128xf32>
    %24 = arith.divf %22, %23 : vector<8x128xf32>
    %25 = arith.select %10, %19, %24 : vector<8x128xi1>, vector<8x128xf32>
    %26 = vector.extract_strided_slice %25 {offsets = [0, 0], sizes = [8, 32], strides = [1, 1]} : vector<8x128xf32> to vector<8x32xf32>
    %27 = vector.extract_strided_slice %25 {offsets = [0, 32], sizes = [8, 32], strides = [1, 1]} : vector<8x128xf32> to vector<8x32xf32>
    %28 = vector.extract_strided_slice %25 {offsets = [0, 64], sizes = [8, 32], strides = [1, 1]} : vector<8x128xf32> to vector<8x32xf32>
    %29 = vector.extract_strided_slice %25 {offsets = [0, 96], sizes = [8, 32], strides = [1, 1]} : vector<8x128xf32> to vector<8x32xf32>
    %30 = arith.mulf %27, %12 : vector<8x32xf32>
    %31 = arith.mulf %26, %29 : vector<8x32xf32>
    %32 = arith.addf %30, %31 : vector<8x32xf32>
    %33 = math.tanh %32 : vector<8x32xf32>
    %34 = arith.mulf %28, %33 : vector<8x32xf32>
    %c1_i32 = arith.constant 1 : i32
    %c8_i32_14 = arith.constant 8 : i32
    %35 = arith.muli %c1_i32, %c8_i32_14 : i32
    %36 = tpu.assume_multiple %35, 8 : i32
    %37 = arith.index_cast %36 : i32 to index
    %c0_15 = arith.constant 0 : index
    %38 = vector.load %arg8[%37, %c0_15] : memref<64x128xf32, #tpu.memory_space<vmem>>, vector<8x128xf32>
    %cst_16 = arith.constant dense<0.000000e+00> : vector<8x128xf32>
    %39 = tpu.matmul %34, %7, %cst_16 {dimension_numbers = #tpu.dot_dimension_numbers<[1], [0], [0], [1], [0, 0, 1, 1], [], []>} : vector<8x32xf32>, vector<32x128xf32>, vector<8x128xf32> -> vector<8x128xf32>
    %40 = arith.addf %38, %39 : vector<8x128xf32>
    %41 = math.tanh %40 : vector<8x128xf32>
    %42 = arith.negf %40 : vector<8x128xf32>
    %43 = math.exp %42 : vector<8x128xf32>
    %cst_17 = arith.constant 1.000000e+00 : f32
    %44 = vector.broadcast %cst_17 : f32 to vector<8x128xf32>
    %45 = arith.addf %44, %43 : vector<8x128xf32>
    %46 = arith.divf %44, %45 : vector<8x128xf32>
    %47 = arith.select %10, %41, %46 : vector<8x128xi1>, vector<8x128xf32>
    %48 = vector.extract_strided_slice %47 {offsets = [0, 0], sizes = [8, 32], strides = [1, 1]} : vector<8x128xf32> to vector<8x32xf32>
    %49 = vector.extract_strided_slice %47 {offsets = [0, 32], sizes = [8, 32], strides = [1, 1]} : vector<8x128xf32> to vector<8x32xf32>
    %50 = vector.extract_strided_slice %47 {offsets = [0, 64], sizes = [8, 32], strides = [1, 1]} : vector<8x128xf32> to vector<8x32xf32>
    %51 = vector.extract_strided_slice %47 {offsets = [0, 96], sizes = [8, 32], strides = [1, 1]} : vector<8x128xf32> to vector<8x32xf32>
    %52 = arith.mulf %49, %32 : vector<8x32xf32>
    %53 = arith.mulf %48, %51 : vector<8x32xf32>
    %54 = arith.addf %52, %53 : vector<8x32xf32>
    %55 = math.tanh %54 : vector<8x32xf32>
    %56 = arith.mulf %50, %55 : vector<8x32xf32>
    %c2_i32 = arith.constant 2 : i32
    %c8_i32_18 = arith.constant 8 : i32
    %57 = arith.muli %c2_i32, %c8_i32_18 : i32
    %58 = tpu.assume_multiple %57, 8 : i32
    %59 = arith.index_cast %58 : i32 to index
    %c0_19 = arith.constant 0 : index
    %60 = vector.load %arg8[%59, %c0_19] : memref<64x128xf32, #tpu.memory_space<vmem>>, vector<8x128xf32>
    %cst_20 = arith.constant dense<0.000000e+00> : vector<8x128xf32>
    %61 = tpu.matmul %56, %7, %cst_20 {dimension_numbers = #tpu.dot_dimension_numbers<[1], [0], [0], [1], [0, 0, 1, 1], [], []>} : vector<8x32xf32>, vector<32x128xf32>, vector<8x128xf32> -> vector<8x128xf32>
    %62 = arith.addf %60, %61 : vector<8x128xf32>
    %63 = math.tanh %62 : vector<8x128xf32>
    %64 = arith.negf %62 : vector<8x128xf32>
    %65 = math.exp %64 : vector<8x128xf32>
    %cst_21 = arith.constant 1.000000e+00 : f32
    %66 = vector.broadcast %cst_21 : f32 to vector<8x128xf32>
    %67 = arith.addf %66, %65 : vector<8x128xf32>
    %68 = arith.divf %66, %67 : vector<8x128xf32>
    %69 = arith.select %10, %63, %68 : vector<8x128xi1>, vector<8x128xf32>
    %70 = vector.extract_strided_slice %69 {offsets = [0, 0], sizes = [8, 32], strides = [1, 1]} : vector<8x128xf32> to vector<8x32xf32>
    %71 = vector.extract_strided_slice %69 {offsets = [0, 32], sizes = [8, 32], strides = [1, 1]} : vector<8x128xf32> to vector<8x32xf32>
    %72 = vector.extract_strided_slice %69 {offsets = [0, 64], sizes = [8, 32], strides = [1, 1]} : vector<8x128xf32> to vector<8x32xf32>
    %73 = vector.extract_strided_slice %69 {offsets = [0, 96], sizes = [8, 32], strides = [1, 1]} : vector<8x128xf32> to vector<8x32xf32>
    %74 = arith.mulf %71, %54 : vector<8x32xf32>
    %75 = arith.mulf %70, %73 : vector<8x32xf32>
    %76 = arith.addf %74, %75 : vector<8x32xf32>
    %77 = math.tanh %76 : vector<8x32xf32>
    %78 = arith.mulf %72, %77 : vector<8x32xf32>
    %c3_i32 = arith.constant 3 : i32
    %c8_i32_22 = arith.constant 8 : i32
    %79 = arith.muli %c3_i32, %c8_i32_22 : i32
    %80 = tpu.assume_multiple %79, 8 : i32
    %81 = arith.index_cast %80 : i32 to index
    %c0_23 = arith.constant 0 : index
    %82 = vector.load %arg8[%81, %c0_23] : memref<64x128xf32, #tpu.memory_space<vmem>>, vector<8x128xf32>
    %cst_24 = arith.constant dense<0.000000e+00> : vector<8x128xf32>
    %83 = tpu.matmul %78, %7, %cst_24 {dimension_numbers = #tpu.dot_dimension_numbers<[1], [0], [0], [1], [0, 0, 1, 1], [], []>} : vector<8x32xf32>, vector<32x128xf32>, vector<8x128xf32> -> vector<8x128xf32>
    %84 = arith.addf %82, %83 : vector<8x128xf32>
    %85 = math.tanh %84 : vector<8x128xf32>
    %86 = arith.negf %84 : vector<8x128xf32>
    %87 = math.exp %86 : vector<8x128xf32>
    %cst_25 = arith.constant 1.000000e+00 : f32
    %88 = vector.broadcast %cst_25 : f32 to vector<8x128xf32>
    %89 = arith.addf %88, %87 : vector<8x128xf32>
    %90 = arith.divf %88, %89 : vector<8x128xf32>
    %91 = arith.select %10, %85, %90 : vector<8x128xi1>, vector<8x128xf32>
    %92 = vector.extract_strided_slice %91 {offsets = [0, 0], sizes = [8, 32], strides = [1, 1]} : vector<8x128xf32> to vector<8x32xf32>
    %93 = vector.extract_strided_slice %91 {offsets = [0, 32], sizes = [8, 32], strides = [1, 1]} : vector<8x128xf32> to vector<8x32xf32>
    %94 = vector.extract_strided_slice %91 {offsets = [0, 64], sizes = [8, 32], strides = [1, 1]} : vector<8x128xf32> to vector<8x32xf32>
    %95 = vector.extract_strided_slice %91 {offsets = [0, 96], sizes = [8, 32], strides = [1, 1]} : vector<8x128xf32> to vector<8x32xf32>
    %96 = arith.mulf %93, %76 : vector<8x32xf32>
    %97 = arith.mulf %92, %95 : vector<8x32xf32>
    %98 = arith.addf %96, %97 : vector<8x32xf32>
    %99 = math.tanh %98 : vector<8x32xf32>
    %100 = arith.mulf %94, %99 : vector<8x32xf32>
    %c4_i32 = arith.constant 4 : i32
    %c8_i32_26 = arith.constant 8 : i32
    %101 = arith.muli %c4_i32, %c8_i32_26 : i32
    %102 = tpu.assume_multiple %101, 8 : i32
    %103 = arith.index_cast %102 : i32 to index
    %c0_27 = arith.constant 0 : index
    %104 = vector.load %arg8[%103, %c0_27] : memref<64x128xf32, #tpu.memory_space<vmem>>, vector<8x128xf32>
    %cst_28 = arith.constant dense<0.000000e+00> : vector<8x128xf32>
    %105 = tpu.matmul %100, %7, %cst_28 {dimension_numbers = #tpu.dot_dimension_numbers<[1], [0], [0], [1], [0, 0, 1, 1], [], []>} : vector<8x32xf32>, vector<32x128xf32>, vector<8x128xf32> -> vector<8x128xf32>
    %106 = arith.addf %104, %105 : vector<8x128xf32>
    %107 = math.tanh %106 : vector<8x128xf32>
    %108 = arith.negf %106 : vector<8x128xf32>
    %109 = math.exp %108 : vector<8x128xf32>
    %cst_29 = arith.constant 1.000000e+00 : f32
    %110 = vector.broadcast %cst_29 : f32 to vector<8x128xf32>
    %111 = arith.addf %110, %109 : vector<8x128xf32>
    %112 = arith.divf %110, %111 : vector<8x128xf32>
    %113 = arith.select %10, %107, %112 : vector<8x128xi1>, vector<8x128xf32>
    %114 = vector.extract_strided_slice %113 {offsets = [0, 0], sizes = [8, 32], strides = [1, 1]} : vector<8x128xf32> to vector<8x32xf32>
    %115 = vector.extract_strided_slice %113 {offsets = [0, 32], sizes = [8, 32], strides = [1, 1]} : vector<8x128xf32> to vector<8x32xf32>
    %116 = vector.extract_strided_slice %113 {offsets = [0, 64], sizes = [8, 32], strides = [1, 1]} : vector<8x128xf32> to vector<8x32xf32>
    %117 = vector.extract_strided_slice %113 {offsets = [0, 96], sizes = [8, 32], strides = [1, 1]} : vector<8x128xf32> to vector<8x32xf32>
    %118 = arith.mulf %115, %98 : vector<8x32xf32>
    %119 = arith.mulf %114, %117 : vector<8x32xf32>
    %120 = arith.addf %118, %119 : vector<8x32xf32>
    %121 = math.tanh %120 : vector<8x32xf32>
    %122 = arith.mulf %116, %121 : vector<8x32xf32>
    %c5_i32 = arith.constant 5 : i32
    %c8_i32_30 = arith.constant 8 : i32
    %123 = arith.muli %c5_i32, %c8_i32_30 : i32
    %124 = tpu.assume_multiple %123, 8 : i32
    %125 = arith.index_cast %124 : i32 to index
    %c0_31 = arith.constant 0 : index
    %126 = vector.load %arg8[%125, %c0_31] : memref<64x128xf32, #tpu.memory_space<vmem>>, vector<8x128xf32>
    %cst_32 = arith.constant dense<0.000000e+00> : vector<8x128xf32>
    %127 = tpu.matmul %122, %7, %cst_32 {dimension_numbers = #tpu.dot_dimension_numbers<[1], [0], [0], [1], [0, 0, 1, 1], [], []>} : vector<8x32xf32>, vector<32x128xf32>, vector<8x128xf32> -> vector<8x128xf32>
    %128 = arith.addf %126, %127 : vector<8x128xf32>
    %129 = math.tanh %128 : vector<8x128xf32>
    %130 = arith.negf %128 : vector<8x128xf32>
    %131 = math.exp %130 : vector<8x128xf32>
    %cst_33 = arith.constant 1.000000e+00 : f32
    %132 = vector.broadcast %cst_33 : f32 to vector<8x128xf32>
    %133 = arith.addf %132, %131 : vector<8x128xf32>
    %134 = arith.divf %132, %133 : vector<8x128xf32>
    %135 = arith.select %10, %129, %134 : vector<8x128xi1>, vector<8x128xf32>
    %136 = vector.extract_strided_slice %135 {offsets = [0, 0], sizes = [8, 32], strides = [1, 1]} : vector<8x128xf32> to vector<8x32xf32>
    %137 = vector.extract_strided_slice %135 {offsets = [0, 32], sizes = [8, 32], strides = [1, 1]} : vector<8x128xf32> to vector<8x32xf32>
    %138 = vector.extract_strided_slice %135 {offsets = [0, 64], sizes = [8, 32], strides = [1, 1]} : vector<8x128xf32> to vector<8x32xf32>
    %139 = vector.extract_strided_slice %135 {offsets = [0, 96], sizes = [8, 32], strides = [1, 1]} : vector<8x128xf32> to vector<8x32xf32>
    %140 = arith.mulf %137, %120 : vector<8x32xf32>
    %141 = arith.mulf %136, %139 : vector<8x32xf32>
    %142 = arith.addf %140, %141 : vector<8x32xf32>
    %143 = math.tanh %142 : vector<8x32xf32>
    %144 = arith.mulf %138, %143 : vector<8x32xf32>
    %c6_i32 = arith.constant 6 : i32
    %c8_i32_34 = arith.constant 8 : i32
    %145 = arith.muli %c6_i32, %c8_i32_34 : i32
    %146 = tpu.assume_multiple %145, 8 : i32
    %147 = arith.index_cast %146 : i32 to index
    %c0_35 = arith.constant 0 : index
    %148 = vector.load %arg8[%147, %c0_35] : memref<64x128xf32, #tpu.memory_space<vmem>>, vector<8x128xf32>
    %cst_36 = arith.constant dense<0.000000e+00> : vector<8x128xf32>
    %149 = tpu.matmul %144, %7, %cst_36 {dimension_numbers = #tpu.dot_dimension_numbers<[1], [0], [0], [1], [0, 0, 1, 1], [], []>} : vector<8x32xf32>, vector<32x128xf32>, vector<8x128xf32> -> vector<8x128xf32>
    %150 = arith.addf %148, %149 : vector<8x128xf32>
    %151 = math.tanh %150 : vector<8x128xf32>
    %152 = arith.negf %150 : vector<8x128xf32>
    %153 = math.exp %152 : vector<8x128xf32>
    %cst_37 = arith.constant 1.000000e+00 : f32
    %154 = vector.broadcast %cst_37 : f32 to vector<8x128xf32>
    %155 = arith.addf %154, %153 : vector<8x128xf32>
    %156 = arith.divf %154, %155 : vector<8x128xf32>
    %157 = arith.select %10, %151, %156 : vector<8x128xi1>, vector<8x128xf32>
    %158 = vector.extract_strided_slice %157 {offsets = [0, 0], sizes = [8, 32], strides = [1, 1]} : vector<8x128xf32> to vector<8x32xf32>
    %159 = vector.extract_strided_slice %157 {offsets = [0, 32], sizes = [8, 32], strides = [1, 1]} : vector<8x128xf32> to vector<8x32xf32>
    %160 = vector.extract_strided_slice %157 {offsets = [0, 64], sizes = [8, 32], strides = [1, 1]} : vector<8x128xf32> to vector<8x32xf32>
    %161 = vector.extract_strided_slice %157 {offsets = [0, 96], sizes = [8, 32], strides = [1, 1]} : vector<8x128xf32> to vector<8x32xf32>
    %162 = arith.mulf %159, %142 : vector<8x32xf32>
    %163 = arith.mulf %158, %161 : vector<8x32xf32>
    %164 = arith.addf %162, %163 : vector<8x32xf32>
    %165 = math.tanh %164 : vector<8x32xf32>
    %166 = arith.mulf %160, %165 : vector<8x32xf32>
    %c7_i32 = arith.constant 7 : i32
    %c8_i32_38 = arith.constant 8 : i32
    %167 = arith.muli %c7_i32, %c8_i32_38 : i32
    %168 = tpu.assume_multiple %167, 8 : i32
    %169 = arith.index_cast %168 : i32 to index
    %c0_39 = arith.constant 0 : index
    %170 = vector.load %arg8[%169, %c0_39] : memref<64x128xf32, #tpu.memory_space<vmem>>, vector<8x128xf32>
    %cst_40 = arith.constant dense<0.000000e+00> : vector<8x128xf32>
    %171 = tpu.matmul %166, %7, %cst_40 {dimension_numbers = #tpu.dot_dimension_numbers<[1], [0], [0], [1], [0, 0, 1, 1], [], []>} : vector<8x32xf32>, vector<32x128xf32>, vector<8x128xf32> -> vector<8x128xf32>
    %172 = arith.addf %170, %171 : vector<8x128xf32>
    %173 = math.tanh %172 : vector<8x128xf32>
    %174 = arith.negf %172 : vector<8x128xf32>
    %175 = math.exp %174 : vector<8x128xf32>
    %cst_41 = arith.constant 1.000000e+00 : f32
    %176 = vector.broadcast %cst_41 : f32 to vector<8x128xf32>
    %177 = arith.addf %176, %175 : vector<8x128xf32>
    %178 = arith.divf %176, %177 : vector<8x128xf32>
    %179 = arith.select %10, %173, %178 : vector<8x128xi1>, vector<8x128xf32>
    %180 = vector.extract_strided_slice %179 {offsets = [0, 0], sizes = [8, 32], strides = [1, 1]} : vector<8x128xf32> to vector<8x32xf32>
    %181 = vector.extract_strided_slice %179 {offsets = [0, 32], sizes = [8, 32], strides = [1, 1]} : vector<8x128xf32> to vector<8x32xf32>
    %182 = vector.extract_strided_slice %179 {offsets = [0, 64], sizes = [8, 32], strides = [1, 1]} : vector<8x128xf32> to vector<8x32xf32>
    %183 = vector.extract_strided_slice %179 {offsets = [0, 96], sizes = [8, 32], strides = [1, 1]} : vector<8x128xf32> to vector<8x32xf32>
    %184 = arith.mulf %181, %164 : vector<8x32xf32>
    %185 = arith.mulf %180, %183 : vector<8x32xf32>
    %186 = arith.addf %184, %185 : vector<8x32xf32>
    %187 = math.tanh %186 : vector<8x32xf32>
    %188 = arith.mulf %182, %187 : vector<8x32xf32>
    %c8_i32_42 = arith.constant 8 : i32
    %c0_43 = arith.constant 0 : index
    %c0_44 = arith.constant 0 : index
    %189 = vector.load %arg5[%c0_43, %c0_44] : memref<32x128xf32, #tpu.memory_space<vmem>>, vector<32x128xf32>
    %cst_45 = arith.constant dense<0.000000e+00> : vector<8x128xf32>
    %190 = tpu.matmul %188, %189, %cst_45 {dimension_numbers = #tpu.dot_dimension_numbers<[1], [0], [0], [1], [0, 0, 1, 1], [], []>} : vector<8x32xf32>, vector<32x128xf32>, vector<8x128xf32> -> vector<8x128xf32>
    %c0_46 = arith.constant 0 : index
    %c0_47 = arith.constant 0 : index
    %191 = vector.load %arg6[%c0_46, %c0_47] : memref<1x128xf32, #tpu.memory_space<vmem>>, vector<1x128xf32>
    %192 = vector.broadcast %191 : vector<1x128xf32> to vector<8x128xf32>
    %193 = arith.addf %190, %192 : vector<8x128xf32>
    %cst_48 = arith.constant dense<0xFF800000> : vector<8xf32>
    %194 = vector.multi_reduction <maximumf>, %193, %cst_48 [1] : vector<8x128xf32> to vector<8xf32>
    %195 = vector.shape_cast %194 : vector<8xf32> to vector<8x1xf32>
    %196 = vector.broadcast %195 : vector<8x1xf32> to vector<8x128xf32>
    %197 = arith.subf %193, %196 : vector<8x128xf32>
    %198 = math.exp %197 : vector<8x128xf32>
    %cst_49 = arith.constant dense<0.000000e+00> : vector<8xf32>
    %199 = vector.multi_reduction <add>, %198, %cst_49 [1] : vector<8x128xf32> to vector<8xf32>
    %200 = vector.shape_cast %199 : vector<8xf32> to vector<8x1xf32>
    %201 = math.log %200 : vector<8x1xf32>
    %202 = arith.addf %201, %195 : vector<8x1xf32>
    %203 = vector.broadcast %202 : vector<8x1xf32> to vector<8x128xf32>
    %204 = arith.subf %193, %203 : vector<8x128xf32>
    %c0_50 = arith.constant 0 : index
    %c0_51 = arith.constant 0 : index
    %205 = vector.load %arg7[%c0_50, %c0_51] : memref<8x128xf32, #tpu.memory_space<vmem>>, vector<8x128xf32>
    tpu.vector_store %arg7[%c0_50, %c0_51], %204 {strides = array<i32>} : memref<8x128xf32, #tpu.memory_space<vmem>>, vector<8x128xf32>,
    return
  }
  func.func @transform_0(%arg0: i32) -> (i32, i32) {
    %c0_i32 = arith.constant 0 : i32
    %c0_i32_0 = arith.constant 0 : i32
    %c0_i32_1 = arith.constant 0 : i32
    return %c0_i32, %c0_i32_0 : i32, i32
  }
  func.func @transform_1(%arg0: i32) -> (i32, i32) {
    %c0_i32 = arith.constant 0 : i32
    %c0_i32_0 = arith.constant 0 : i32
    %c0_i32_1 = arith.constant 0 : i32
    return %c0_i32, %c0_i32_0 : i32, i32
  }
  func.func @transform_2(%arg0: i32) -> (i32, i32) {
    %c0_i32 = arith.constant 0 : i32
    %c0_i32_0 = arith.constant 0 : i32
    %c0_i32_1 = arith.constant 0 : i32
    return %c0_i32, %c0_i32_0 : i32, i32
  }
  func.func @transform_3(%arg0: i32) -> (i32, i32) {
    %c0_i32 = arith.constant 0 : i32
    %c0_i32_0 = arith.constant 0 : i32
    %c0_i32_1 = arith.constant 0 : i32
    return %c0_i32, %c0_i32_0 : i32, i32
  }
  func.func @transform_4(%arg0: i32) -> (i32, i32) {
    %c0_i32 = arith.constant 0 : i32
    %c0_i32_0 = arith.constant 0 : i32
    %c0_i32_1 = arith.constant 0 : i32
    return %c0_i32, %c0_i32_0 : i32, i32
  }
  func.func @transform_5(%arg0: i32) -> (i32, i32) {
    %c0_i32 = arith.constant 0 : i32
    %c0_i32_0 = arith.constant 0 : i32
    %c0_i32_1 = arith.constant 0 : i32
    return %c0_i32, %c0_i32_0 : i32, i32
  }
  func.func @transform_6(%arg0: i32) -> (i32, i32) {
    %c0_i32 = arith.constant 0 : i32
    %c0_i32_0 = arith.constant 0 : i32
    %c0_i32_1 = arith.constant 0 : i32
    return %c0_i32, %c0_i32_0 : i32, i32
  }
}

</mosaic_0001>

<llo_original>
// kernel: tpu_custom_call.1
$region0: #{tpu_custom_call.1}
  #allocation0 [shape = 'u32[]', space=smem, size = 0x4, offset = 0x4, fixed_abs, tag = 'smem constant byte address 0x4 - core index']
  #allocation1 [shape = 'u32[144,128]{1,0:T(1,128)}', space=vmem, size = 0x12000, scoped, tag = 'internal scratch']
  #allocation2 [shape = 'f32[64,128]{1,0:T(8,128)}', space=vmem, size = 0x8000, scoped, tag = 'scratch operand']
  %s0 = inlined_call_operand.vmem [shape: f32[64,16], index: 0, kind: input, shape index: {}]
  %s1 = inlined_call_operand.vmem [shape: f32[16,128], index: 1, kind: input, shape index: {}]
  %s2 = inlined_call_operand.vmem [shape: f32[32,128], index: 2, kind: input, shape index: {}]
  %s3 = inlined_call_operand.vmem [shape: f32[1,128], index: 3, kind: input, shape index: {}]
  %s4 = inlined_call_operand.vmem [shape: f32[32,128], index: 4, kind: input, shape index: {}]
  %s5 = inlined_call_operand.vmem [shape: f32[1,128], index: 5, kind: input, shape index: {}]
  %s6 = inlined_call_operand.hbm [shape: f32[8,128], index: 6, kind: output, shape index: {}]
  %s7 = sld [smem:[#allocation0]]
  $region34: #{tpu_custom_call.1} parent=0
    _
  %s9 = ssub.s32 1, %s7
  %s10 = scalar_select 0, %s9, %s7
  $region1: #{tpu_custom_call.1} parent=0
    #allocation3 [shape = 'u8[4096]{0}', space=vmem, size = 0x1000, scoped, tag = 'output window, operand 0, single buffered']
    #allocation4 [shape = 's32[1]{0}', space=sflag, size = 0x4, scoped, tag = 'scoped memory for tpu_custom_call.1']
    %11 = vsyncpa [#allocation4], 0
    // Predicated region
    $region2: #{tpu_custom_call.1} parent=1 // pred_check
      _
    $region3: #{tpu_custom_call.1} parent=1 // pred_check_branch
      %13 = sbr.rel (0) target = $region5
    $region4: #{tpu_custom_call.1} parent=1 // pred_region
      _
    $region5: #{tpu_custom_call.1} parent=1 // pred_fallthru
      _
    // Predicated region
    $region6: #{tpu_custom_call.1} parent=1 // pred_check
      _
    $region7: #{tpu_custom_call.1} parent=1 // pred_check_branch
      %15 = sbr.rel (0) target = $region9
    $region8: #{tpu_custom_call.1} parent=1 // pred_region
      _
    $region9: #{tpu_custom_call.1} parent=1 // pred_fallthru
      _
    // Predicated region
    $region10: #{tpu_custom_call.1} parent=1 // pred_check
      _
    $region11: #{tpu_custom_call.1} parent=1 // pred_check_branch
      %17 = sbr.rel (0) target = $region13
    $region12: #{tpu_custom_call.1} parent=1 // pred_region
      _
    $region13: #{tpu_custom_call.1} parent=1 // pred_fallthru
      _
    // Predicated region
    $region14: #{tpu_custom_call.1} parent=1 // pred_check
      _
    $region15: #{tpu_custom_call.1} parent=1 // pred_check_branch
      %19 = sbr.rel (0) target = $region17
    $region16: #{tpu_custom_call.1} parent=1 // pred_region
      _
    $region17: #{tpu_custom_call.1} parent=1 // pred_fallthru
      _
    // Predicated region
    $region18: #{tpu_custom_call.1} parent=1 // pred_check
      _
    $region19: #{tpu_custom_call.1} parent=1 // pred_check_branch
      %21 = sbr.rel (0) target = $region21
    $region20: #{tpu_custom_call.1} parent=1 // pred_region
      _
    $region21: #{tpu_custom_call.1} parent=1 // pred_fallthru
      _
    // Predicated region
    $region22: #{tpu_custom_call.1} parent=1 // pred_check
      _
    $region23: #{tpu_custom_call.1} parent=1 // pred_check_branch
      %23 = sbr.rel (0) target = $region25
    $region24: #{tpu_custom_call.1} parent=1 // pred_region
      _
    $region25: #{tpu_custom_call.1} parent=1 // pred_fallthru
      _
    %v24 = vld [vmem:[%s0] sm:$0xff]
    %v25 = vld [vmem:[%s0 + $0x8] sm:$0xff]
    %v26 = vld [vmem:[%s0 + $0x10] sm:$0xff]
    %v27 = vld [vmem:[%s0 + $0x18] sm:$0xff]
    %v28 = vld [vmem:[%s0 + $0x20] sm:$0xff]
    %v29 = vld [vmem:[%s0 + $0x28] sm:$0xff]
    %v30 = vld [vmem:[%s0 + $0x30] sm:$0xff]
    %v31 = vld [vmem:[%s0 + $0x38] sm:$0xff]
    %v32 = vld [vmem:[%s1] sm:$0xff]
    %v33 = vld [vmem:[%s1 + $0x8] sm:$0xff]
    %v34 = vld [vmem:[%s3] sm:$0x1]
    %v36 = vlaneseq
    %v37 = vshrl.u32 %v36, 7
    %v38 = vsub.s32 0, %v37
    %v39 = vrot.slane %v34, %v38
    %vm41 = vcmask 130048
    %v43 = vsel %vm41, %v24, 0
    %v46 = vsel %vm41, %v25, 0
    %v49 = vsel %vm41, %v26, 0
    %v52 = vsel %vm41, %v27, 0
    %v55 = vsel %vm41, %v28, 0
    %v58 = vsel %vm41, %v29, 0
    %v61 = vsel %vm41, %v30, 0
    %v64 = vsel %vm41, %v31, 0
    %66 = vmatprep.subr.mxu0 0.0
    %67 = vmatpush1.msra.mxu0 %v32
    %68 = vmatprep.subr.mxu0 0.0
    %69 = vmatpush1.msra.mxu0 %v33
    %70 = vmatprep.subr.mxu0 0.0
    %71 = vmatpush1.msra.mxu0 0.0
    %72 = vmatprep.subr.mxu0 0.0
    %73 = vmatpush1.msra.mxu0 0.0
    %74 = vmatprep.subr.mxu0 0.0
    %75 = vmatpush1.msra.mxu0 0.0
    %76 = vmatprep.subr.mxu0 0.0
    %77 = vmatpush1.msra.mxu0 0.0
    %78 = vmatprep.subr.mxu0 0.0
    %79 = vmatpush1.msra.mxu0 0.0
    %80 = vmatprep.subr.mxu0 0.0
    %81 = vmatpush1.msra.mxu0 0.0
    %82 = vmatprep.subr.mxu0 0.0
    %83 = vmatpush1.msra.mxu0 0.0
    %84 = vmatprep.subr.mxu0 0.0
    %85 = vmatpush1.msra.mxu0 0.0
    %86 = vmatprep.subr.mxu0 0.0
    %87 = vmatpush1.msra.mxu0 0.0
    %88 = vmatprep.subr.mxu0 0.0
    %89 = vmatpush1.msra.mxu0 0.0
    %90 = vmatprep.subr.mxu0 0.0
    %91 = vmatpush1.msra.mxu0 0.0
    %92 = vmatprep.subr.mxu0 0.0
    %93 = vmatpush1.msra.mxu0 0.0
    %94 = vmatprep.subr.mxu0 0.0
    %95 = vmatpush1.msra.mxu0 0.0
    %96 = vmatprep.subr.mxu0 0.0
    %97 = vmatpush1.msra.mxu0 0.0
    %98 = vmatprep.subr.mxu0 0.0
    %99 = vmatpush1.msra.mxu0 0.0
    %100 = vmatprep.subr.mxu0 0.0
    %101 = vmatpush1.msra.mxu0 0.0
    %102 = vmatprep.subr.mxu0 0.0
    %103 = vmatpush1.msra.mxu0 0.0
    %104 = vmatprep.subr.mxu0 0.0
    %105 = vmatpush1.msra.mxu0 0.0
    %106 = vmatprep.subr.mxu0 0.0
    %107 = vmatpush1.msra.mxu0 0.0
    %108 = vmatprep.subr.mxu0 0.0
    %109 = vmatpush1.msra.mxu0 0.0
    %110 = vmatprep.subr.mxu0 0.0
    %111 = vmatpush1.msra.mxu0 0.0
    %112 = vmatprep.subr.mxu0 0.0
    %113 = vmatpush1.msra.mxu0 0.0
    %114 = vmatprep.subr.mxu0 0.0
    %115 = vmatpush1.msra.mxu0 0.0
    %116 = vmatprep.subr.mxu0 0.0
    %117 = vmatpush1.msra.mxu0 0.0
    %118 = vmatprep.subr.mxu0 0.0
    %119 = vmatpush1.msra.mxu0 0.0
    %120 = vmatprep.subr.mxu0 0.0
    %121 = vmatpush1.msra.mxu0 0.0
    %122 = vmatprep.subr.mxu0 0.0
    %123 = vmatpush1.msra.mxu0 0.0
    %124 = vmatprep.subr.mxu0 0.0
    %125 = vmatpush1.msra.mxu0 0.0
    %126 = vmatprep.subr.mxu0 0.0
    %127 = vmatpush1.msra.mxu0 0.0
    %128 = vmatprep.subr.mxu0 0.0
    %129 = vmatpush1.msra.mxu0 0.0
    %130 = vmatprep.mubr.f32.mxu0 0.0
    %131 = vmatmul.mubr.f32.gmra.mrb[0].mxu0 %v43
    %v132 = vpop.f32.mrb[0].mxu0
    %v133 = vadd.f32 %v39, %v132
    %v134 = vpop.f32.mrb[0].mxu0
    %135 = vmatprep.mubr.f32.mxu0 0.0
    %136 = vmatmul.mubr.f32.gmra.mrb[0].mxu0 %v46
    %v137 = vpop.f32.mrb[0].mxu0
    %v138 = vadd.f32 %v39, %v137
    %v139 = vpop.f32.mrb[0].mxu0
    %140 = vmatprep.mubr.f32.mxu0 0.0
    %141 = vmatmul.mubr.f32.gmra.mrb[0].mxu0 %v49
    %v142 = vpop.f32.mrb[0].mxu0
    %v143 = vadd.f32 %v39, %v142
    %v144 = vpop.f32.mrb[0].mxu0
    %145 = vmatprep.mubr.f32.mxu0 0.0
    %146 = vmatmul.mubr.f32.gmra.mrb[0].mxu0 %v52
    %v147 = vpop.f32.mrb[0].mxu0
    %v148 = vadd.f32 %v39, %v147
    %v149 = vpop.f32.mrb[0].mxu0
    %150 = vmatprep.mubr.f32.mxu0 0.0
    %151 = vmatmul.mubr.f32.gmra.mrb[0].mxu0 %v55
    %v152 = vpop.f32.mrb[0].mxu0
    %v153 = vadd.f32 %v39, %v152
    %v154 = vpop.f32.mrb[0].mxu0
    %155 = vmatprep.mubr.f32.mxu0 0.0
    %156 = vmatmul.mubr.f32.gmra.mrb[0].mxu0 %v58
    %v157 = vpop.f32.mrb[0].mxu0
    %v158 = vadd.f32 %v39, %v157
    %v159 = vpop.f32.mrb[0].mxu0
    %160 = vmatprep.mubr.f32.mxu0 0.0
    %161 = vmatmul.mubr.f32.gmra.mrb[0].mxu0 %v61
    %v162 = vpop.f32.mrb[0].mxu0
    %v163 = vadd.f32 %v39, %v162
    %v164 = vpop.f32.mrb[0].mxu0
    %165 = vmatprep.mubr.f32.mxu0 0.0
    %166 = vmatmul.mubr.f32.gmra.mrb[0].mxu0 %v64
    %v167 = vpop.f32.mrb[0].mxu0
    %v168 = vadd.f32 %v39, %v167
    %v169 = vpop.f32.mrb[0].mxu0
    %170 = vdwg.mxu0
    %171 = vst [vmem:[#allocation2] sm:$0xff] %v133
    %172 = vst [vmem:[#allocation2 + $0x8] sm:$0xff] %v138
    %173 = vst [vmem:[#allocation2 + $0x10] sm:$0xff] %v143
    %174 = vst [vmem:[#allocation2 + $0x18] sm:$0xff] %v148
    %175 = vst [vmem:[#allocation2 + $0x20] sm:$0xff] %v153
    %176 = vst [vmem:[#allocation2 + $0x28] sm:$0xff] %v158
    %177 = vst [vmem:[#allocation2 + $0x30] sm:$0xff] %v163
    %178 = vst [vmem:[#allocation2 + $0x38] sm:$0xff] %v168
    %v179 = vld [vmem:[%s2] sm:$0xff]
    %v180 = vld [vmem:[%s2 + $0x8] sm:$0xff]
    %v181 = vld [vmem:[%s2 + $0x10] sm:$0xff]
    %v182 = vld [vmem:[%s2 + $0x18] sm:$0xff]
    %v183 = vlaneseq
    %v184 = vand.u32 %v183, 127
    %vm185 = vcmp.ge.s32.totalorder %v184, 96
    %v186 = vld [vmem:[#allocation2] sm:$0xff]
    %vm187 = vcmask 261120
    %v189 = vsel %vm187, 0.0, 0
    %191 = vmatprep.subr.mxu0 0.0
    %192 = vmatpush1.msra.mxu0 %v179
    %193 = vmatprep.subr.mxu0 0.0
    %194 = vmatpush1.msra.mxu0 %v180
    %195 = vmatprep.subr.mxu0 0.0
    %196 = vmatpush1.msra.mxu0 %v181
    %197 = vmatprep.subr.mxu0 0.0
    %198 = vmatpush1.msra.mxu0 %v182
    %199 = vmatprep.subr.mxu0 0.0
    %200 = vmatpush1.msra.mxu0 0.0
    %201 = vmatprep.subr.mxu0 0.0
    %202 = vmatpush1.msra.mxu0 0.0
    %203 = vmatprep.subr.mxu0 0.0
    %204 = vmatpush1.msra.mxu0 0.0
    %205 = vmatprep.subr.mxu0 0.0
    %206 = vmatpush1.msra.mxu0 0.0
    %207 = vmatprep.subr.mxu0 0.0
    %208 = vmatpush1.msra.mxu0 0.0
    %209 = vmatprep.subr.mxu0 0.0
    %210 = vmatpush1.msra.mxu0 0.0
    %211 = vmatprep.subr.mxu0 0.0
    %212 = vmatpush1.msra.mxu0 0.0
    %213 = vmatprep.subr.mxu0 0.0
    %214 = vmatpush1.msra.mxu0 0.0
    %215 = vmatprep.subr.mxu0 0.0
    %216 = vmatpush1.msra.mxu0 0.0
    %217 = vmatprep.subr.mxu0 0.0
    %218 = vmatpush1.msra.mxu0 0.0
    %219 = vmatprep.subr.mxu0 0.0
    %220 = vmatpush1.msra.mxu0 0.0
    %221 = vmatprep.subr.mxu0 0.0
    %222 = vmatpush1.msra.mxu0 0.0
    %223 = vmatprep.subr.mxu0 0.0
    %224 = vmatpush1.msra.mxu0 0.0
    %225 = vmatprep.subr.mxu0 0.0
    %226 = vmatpush1.msra.mxu0 0.0
    %227 = vmatprep.subr.mxu0 0.0
    %228 = vmatpush1.msra.mxu0 0.0
    %229 = vmatprep.subr.mxu0 0.0
    %230 = vmatpush1.msra.mxu0 0.0
    %231 = vmatprep.subr.mxu0 0.0
    %232 = vmatpush1.msra.mxu0 0.0
    %233 = vmatprep.subr.mxu0 0.0
    %234 = vmatpush1.msra.mxu0 0.0
    %235 = vmatprep.subr.mxu0 0.0
    %236 = vmatpush1.msra.mxu0 0.0
    %237 = vmatprep.subr.mxu0 0.0
    %238 = vmatpush1.msra.mxu0 0.0
    %239 = vmatprep.subr.mxu0 0.0
    %240 = vmatpush1.msra.mxu0 0.0
    %241 = vmatprep.subr.mxu0 0.0
    %242 = vmatpush1.msra.mxu0 0.0
    %243 = vmatprep.subr.mxu0 0.0
    %244 = vmatpush1.msra.mxu0 0.0
    %245 = vmatprep.subr.mxu0 0.0
    %246 = vmatpush1.msra.mxu0 0.0
    %247 = vmatprep.subr.mxu0 0.0
    %248 = vmatpush1.msra.mxu0 0.0
    %249 = vmatprep.subr.mxu0 0.0
    %250 = vmatpush1.msra.mxu0 0.0
    %251 = vmatprep.subr.mxu0 0.0
    %252 = vmatpush1.msra.mxu0 0.0
    %253 = vmatprep.subr.mxu0 0.0
    %254 = vmatpush1.msra.mxu0 0.0
    %255 = vmatprep.mubr.f32.mxu0 0.0
    %256 = vmatmul.mubr.f32.gmra.mrb[0].mxu0 %v189
    %v257 = vpop.f32.mrb[0].mxu0
    %v258 = vadd.f32 0.0, %v257
    %v259 = vpop.f32.mrb[0].mxu0
    %260 = vdwg.mxu0
    %v261 = vadd.f32 %v186, %v258
    %v262 = vtanh.pop %v261
    %v263 = vxor.u32 %v261, 2147483648
    %v264 = vmul.f32 %v263, 1.442695
    %v265 = vpow.pop %v264
    %v266 = vadd.f32 %v265, 1.0
    %v267 = vrcp.pop %v266
    %v268 = vmul.f32 1.0, %v267
    %v269 = vsel %vm185, %v262, %v268
    %v270 = vmul.f32 %v269, 0.0
    %272 = vrot.lane.b32.xlu0 %v269, 32
    %v273 = vpop.permute.xlu0 %272
    %v275 = vmul.f32 %v269, %v273
    %277 = vrot.lane.b32.xlu0 %v275, 32
    %v278 = vpop.permute.xlu0 %277
    %v280 = vadd.f32 %v270, %v278
    %v281 = vtanh.pop %v280
    %283 = vrot.lane.b32.xlu0 %v281, 32
    %v284 = vpop.permute.xlu0 %283
    %v286 = vmul.f32 %v269, %v284
    %s287 = scalar_lea.vmem [#allocation2], 8
    %v288 = vld [vmem:[%s287] sm:$0xff]
    %290 = vrot.lane.b32.xlu0 %v286, 64
    %v291 = vpop.permute.xlu0 %290
    %v292 = vsel %vm187, %v291, 0
    %294 = vmatprep.subr.mxu0 0.0
    %295 = vmatpush1.msra.mxu0 %v179
    %296 = vmatprep.subr.mxu0 0.0
    %297 = vmatpush1.msra.mxu0 %v180
    %298 = vmatprep.subr.mxu0 0.0
    %299 = vmatpush1.msra.mxu0 %v181
    %300 = vmatprep.subr.mxu0 0.0
    %301 = vmatpush1.msra.mxu0 %v182
    %302 = vmatprep.subr.mxu0 0.0
    %303 = vmatpush1.msra.mxu0 0.0
    %304 = vmatprep.subr.mxu0 0.0
    %305 = vmatpush1.msra.mxu0 0.0
    %306 = vmatprep.subr.mxu0 0.0
    %307 = vmatpush1.msra.mxu0 0.0
    %308 = vmatprep.subr.mxu0 0.0
    %309 = vmatpush1.msra.mxu0 0.0
    %310 = vmatprep.subr.mxu0 0.0
    %311 = vmatpush1.msra.mxu0 0.0
    %312 = vmatprep.subr.mxu0 0.0
    %313 = vmatpush1.msra.mxu0 0.0
    %314 = vmatprep.subr.mxu0 0.0
    %315 = vmatpush1.msra.mxu0 0.0
    %316 = vmatprep.subr.mxu0 0.0
    %317 = vmatpush1.msra.mxu0 0.0
    %318 = vmatprep.subr.mxu0 0.0
    %319 = vmatpush1.msra.mxu0 0.0
    %320 = vmatprep.subr.mxu0 0.0
    %321 = vmatpush1.msra.mxu0 0.0
    %322 = vmatprep.subr.mxu0 0.0
    %323 = vmatpush1.msra.mxu0 0.0
    %324 = vmatprep.subr.mxu0 0.0
    %325 = vmatpush1.msra.mxu0 0.0
    %326 = vmatprep.subr.mxu0 0.0
    %327 = vmatpush1.msra.mxu0 0.0
    %328 = vmatprep.subr.mxu0 0.0
    %329 = vmatpush1.msra.mxu0 0.0
    %330 = vmatprep.subr.mxu0 0.0
    %331 = vmatpush1.msra.mxu0 0.0
    %332 = vmatprep.subr.mxu0 0.0
    %333 = vmatpush1.msra.mxu0 0.0
    %334 = vmatprep.subr.mxu0 0.0
    %335 = vmatpush1.msra.mxu0 0.0
    %336 = vmatprep.subr.mxu0 0.0
    %337 = vmatpush1.msra.mxu0 0.0
    %338 = vmatprep.subr.mxu0 0.0
    %339 = vmatpush1.msra.mxu0 0.0
    %340 = vmatprep.subr.mxu0 0.0
    %341 = vmatpush1.msra.mxu0 0.0
    %342 = vmatprep.subr.mxu0 0.0
    %343 = vmatpush1.msra.mxu0 0.0
    %344 = vmatprep.subr.mxu0 0.0
    %345 = vmatpush1.msra.mxu0 0.0
    %346 = vmatprep.subr.mxu0 0.0
    %347 = vmatpush1.msra.mxu0 0.0
    %348 = vmatprep.subr.mxu0 0.0
    %349 = vmatpush1.msra.mxu0 0.0
    %350 = vmatprep.subr.mxu0 0.0
    %351 = vmatpush1.msra.mxu0 0.0
    %352 = vmatprep.subr.mxu0 0.0
    %353 = vmatpush1.msra.mxu0 0.0
    %354 = vmatprep.subr.mxu0 0.0
    %355 = vmatpush1.msra.mxu0 0.0
    %356 = vmatprep.subr.mxu0 0.0
    %357 = vmatpush1.msra.mxu0 0.0
    %358 = vmatprep.mubr.f32.mxu0 0.0
    %359 = vmatmul.mubr.f32.gmra.mrb[0].mxu0 %v292
    %v360 = vpop.f32.mrb[0].mxu0
    %v361 = vadd.f32 0.0, %v360
    %v362 = vpop.f32.mrb[0].mxu0
    %363 = vdwg.mxu0
    %v364 = vadd.f32 %v288, %v361
    %v365 = vtanh.pop %v364
    %v366 = vxor.u32 %v364, 2147483648
    %v367 = vmul.f32 %v366, 1.442695
    %v368 = vpow.pop %v367
    %v369 = vadd.f32 %v368, 1.0
    %v370 = vrcp.pop %v369
    %v371 = vmul.f32 1.0, %v370
    %v372 = vsel %vm185, %v365, %v371
    %v373 = vmul.f32 %v372, %v280
    %375 = vrot.lane.b32.xlu0 %v372, 32
    %v376 = vpop.permute.xlu0 %375
    %v378 = vmul.f32 %v372, %v376
    %380 = vrot.lane.b32.xlu0 %v378, 32
    %v381 = vpop.permute.xlu0 %380
    %v383 = vadd.f32 %v373, %v381
    %v384 = vtanh.pop %v383
    %386 = vrot.lane.b32.xlu0 %v384, 32
    %v387 = vpop.permute.xlu0 %386
    %v389 = vmul.f32 %v372, %v387
    %s390 = scalar_lea.vmem [#allocation2], 16
    %v391 = vld [vmem:[%s390] sm:$0xff]
    %393 = vrot.lane.b32.xlu0 %v389, 64
    %v394 = vpop.permute.xlu0 %393
    %v395 = vsel %vm187, %v394, 0
    %397 = vmatprep.subr.mxu0 0.0
    %398 = vmatpush1.msra.mxu0 %v179
    %399 = vmatprep.subr.mxu0 0.0
    %400 = vmatpush1.msra.mxu0 %v180
    %401 = vmatprep.subr.mxu0 0.0
    %402 = vmatpush1.msra.mxu0 %v181
    %403 = vmatprep.subr.mxu0 0.0
    %404 = vmatpush1.msra.mxu0 %v182
    %405 = vmatprep.subr.mxu0 0.0
    %406 = vmatpush1.msra.mxu0 0.0
    %407 = vmatprep.subr.mxu0 0.0
    %408 = vmatpush1.msra.mxu0 0.0
    %409 = vmatprep.subr.mxu0 0.0
    %410 = vmatpush1.msra.mxu0 0.0
    %411 = vmatprep.subr.mxu0 0.0
    %412 = vmatpush1.msra.mxu0 0.0
    %413 = vmatprep.subr.mxu0 0.0
    %414 = vmatpush1.msra.mxu0 0.0
    %415 = vmatprep.subr.mxu0 0.0
    %416 = vmatpush1.msra.mxu0 0.0
    %417 = vmatprep.subr.mxu0 0.0
    %418 = vmatpush1.msra.mxu0 0.0
    %419 = vmatprep.subr.mxu0 0.0
    %420 = vmatpush1.msra.mxu0 0.0
    %421 = vmatprep.subr.mxu0 0.0
    %422 = vmatpush1.msra.mxu0 0.0
    %423 = vmatprep.subr.mxu0 0.0
    %424 = vmatpush1.msra.mxu0 0.0
    %425 = vmatprep.subr.mxu0 0.0
    %426 = vmatpush1.msra.mxu0 0.0
    %427 = vmatprep.subr.mxu0 0.0
    %428 = vmatpush1.msra.mxu0 0.0
    %429 = vmatprep.subr.mxu0 0.0
    %430 = vmatpush1.msra.mxu0 0.0
    %431 = vmatprep.subr.mxu0 0.0
    %432 = vmatpush1.msra.mxu0 0.0
    %433 = vmatprep.subr.mxu0 0.0
    %434 = vmatpush1.msra.mxu0 0.0
    %435 = vmatprep.subr.mxu0 0.0
    %436 = vmatpush1.msra.mxu0 0.0
    %437 = vmatprep.subr.mxu0 0.0
    %438 = vmatpush1.msra.mxu0 0.0
    %439 = vmatprep.subr.mxu0 0.0
    %440 = vmatpush1.msra.mxu0 0.0
    %441 = vmatprep.subr.mxu0 0.0
    %442 = vmatpush1.msra.mxu0 0.0
    %443 = vmatprep.subr.mxu0 0.0
    %444 = vmatpush1.msra.mxu0 0.0
    %445 = vmatprep.subr.mxu0 0.0
    %446 = vmatpush1.msra.mxu0 0.0
    %447 = vmatprep.subr.mxu0 0.0
    %448 = vmatpush1.msra.mxu0 0.0
    %449 = vmatprep.subr.mxu0 0.0
    %450 = vmatpush1.msra.mxu0 0.0
    %451 = vmatprep.subr.mxu0 0.0
    %452 = vmatpush1.msra.mxu0 0.0
    %453 = vmatprep.subr.mxu0 0.0
    %454 = vmatpush1.msra.mxu0 0.0
    %455 = vmatprep.subr.mxu0 0.0
    %456 = vmatpush1.msra.mxu0 0.0
    %457 = vmatprep.subr.mxu0 0.0
    %458 = vmatpush1.msra.mxu0 0.0
    %459 = vmatprep.subr.mxu0 0.0
    %460 = vmatpush1.msra.mxu0 0.0
    %461 = vmatprep.mubr.f32.mxu0 0.0
    %462 = vmatmul.mubr.f32.gmra.mrb[0].mxu0 %v395
    %v463 = vpop.f32.mrb[0].mxu0
    %v464 = vadd.f32 0.0, %v463
    %v465 = vpop.f32.mrb[0].mxu0
    %466 = vdwg.mxu0
    %v467 = vadd.f32 %v391, %v464
    %v468 = vtanh.pop %v467
    %v469 = vxor.u32 %v467, 2147483648
    %v470 = vmul.f32 %v469, 1.442695
    %v471 = vpow.pop %v470
    %v472 = vadd.f32 %v471, 1.0
    %v473 = vrcp.pop %v472
    %v474 = vmul.f32 1.0, %v473
    %v475 = vsel %vm185, %v468, %v474
    %v476 = vmul.f32 %v475, %v383
    %478 = vrot.lane.b32.xlu0 %v475, 32
    %v479 = vpop.permute.xlu0 %478
    %v481 = vmul.f32 %v475, %v479
    %483 = vrot.lane.b32.xlu0 %v481, 32
    %v484 = vpop.permute.xlu0 %483
    %v486 = vadd.f32 %v476, %v484
    %v487 = vtanh.pop %v486
    %489 = vrot.lane.b32.xlu0 %v487, 32
    %v490 = vpop.permute.xlu0 %489
    %v492 = vmul.f32 %v475, %v490
    %s493 = scalar_lea.vmem [#allocation2], 24
    %v494 = vld [vmem:[%s493] sm:$0xff]
    %496 = vrot.lane.b32.xlu0 %v492, 64
    %v497 = vpop.permute.xlu0 %496
    %v498 = vsel %vm187, %v497, 0
    %500 = vmatprep.subr.mxu0 0.0
    %501 = vmatpush1.msra.mxu0 %v179
    %502 = vmatprep.subr.mxu0 0.0
    %503 = vmatpush1.msra.mxu0 %v180
    %504 = vmatprep.subr.mxu0 0.0
    %505 = vmatpush1.msra.mxu0 %v181
    %506 = vmatprep.subr.mxu0 0.0
    %507 = vmatpush1.msra.mxu0 %v182
    %508 = vmatprep.subr.mxu0 0.0
    %509 = vmatpush1.msra.mxu0 0.0
    %510 = vmatprep.subr.mxu0 0.0
    %511 = vmatpush1.msra.mxu0 0.0
    %512 = vmatprep.subr.mxu0 0.0
    %513 = vmatpush1.msra.mxu0 0.0
    %514 = vmatprep.subr.mxu0 0.0
    %515 = vmatpush1.msra.mxu0 0.0
    %516 = vmatprep.subr.mxu0 0.0
    %517 = vmatpush1.msra.mxu0 0.0
    %518 = vmatprep.subr.mxu0 0.0
    %519 = vmatpush1.msra.mxu0 0.0
    %520 = vmatprep.subr.mxu0 0.0
    %521 = vmatpush1.msra.mxu0 0.0
    %522 = vmatprep.subr.mxu0 0.0
    %523 = vmatpush1.msra.mxu0 0.0
    %524 = vmatprep.subr.mxu0 0.0
    %525 = vmatpush1.msra.mxu0 0.0
    %526 = vmatprep.subr.mxu0 0.0
    %527 = vmatpush1.msra.mxu0 0.0
    %528 = vmatprep.subr.mxu0 0.0
    %529 = vmatpush1.msra.mxu0 0.0
    %530 = vmatprep.subr.mxu0 0.0
    %531 = vmatpush1.msra.mxu0 0.0
    %532 = vmatprep.subr.mxu0 0.0
    %533 = vmatpush1.msra.mxu0 0.0
    %534 = vmatprep.subr.mxu0 0.0
    %535 = vmatpush1.msra.mxu0 0.0
    %536 = vmatprep.subr.mxu0 0.0
    %537 = vmatpush1.msra.mxu0 0.0
    %538 = vmatprep.subr.mxu0 0.0
    %539 = vmatpush1.msra.mxu0 0.0
    %540 = vmatprep.subr.mxu0 0.0
    %541 = vmatpush1.msra.mxu0 0.0
    %542 = vmatprep.subr.mxu0 0.0
    %543 = vmatpush1.msra.mxu0 0.0
    %544 = vmatprep.subr.mxu0 0.0
    %545 = vmatpush1.msra.mxu0 0.0
    %546 = vmatprep.subr.mxu0 0.0
    %547 = vmatpush1.msra.mxu0 0.0
    %548 = vmatprep.subr.mxu0 0.0
    %549 = vmatpush1.msra.mxu0 0.0
    %550 = vmatprep.subr.mxu0 0.0
    %551 = vmatpush1.msra.mxu0 0.0
    %552 = vmatprep.subr.mxu0 0.0
    %553 = vmatpush1.msra.mxu0 0.0
    %554 = vmatprep.subr.mxu0 0.0
    %555 = vmatpush1.msra.mxu0 0.0
    %556 = vmatprep.subr.mxu0 0.0
    %557 = vmatpush1.msra.mxu0 0.0
    %558 = vmatprep.subr.mxu0 0.0
    %559 = vmatpush1.msra.mxu0 0.0
    %560 = vmatprep.subr.mxu0 0.0
    %561 = vmatpush1.msra.mxu0 0.0
    %562 = vmatprep.subr.mxu0 0.0
    %563 = vmatpush1.msra.mxu0 0.0
    %564 = vmatprep.mubr.f32.mxu0 0.0
    %565 = vmatmul.mubr.f32.gmra.mrb[0].mxu0 %v498
    %v566 = vpop.f32.mrb[0].mxu0
    %v567 = vadd.f32 0.0, %v566
    %v568 = vpop.f32.mrb[0].mxu0
    %569 = vdwg.mxu0
    %v570 = vadd.f32 %v494, %v567
    %v571 = vtanh.pop %v570
    %v572 = vxor.u32 %v570, 2147483648
    %v573 = vmul.f32 %v572, 1.442695
    %v574 = vpow.pop %v573
    %v575 = vadd.f32 %v574, 1.0
    %v576 = vrcp.pop %v575
    %v577 = vmul.f32 1.0, %v576
    %v578 = vsel %vm185, %v571, %v577
    %v579 = vmul.f32 %v578, %v486
    %581 = vrot.lane.b32.xlu0 %v578, 32
    %v582 = vpop.permute.xlu0 %581
    %v584 = vmul.f32 %v578, %v582
    %586 = vrot.lane.b32.xlu0 %v584, 32
    %v587 = vpop.permute.xlu0 %586
    %v589 = vadd.f32 %v579, %v587
    %v590 = vtanh.pop %v589
    %592 = vrot.lane.b32.xlu0 %v590, 32
    %v593 = vpop.permute.xlu0 %592
    %v595 = vmul.f32 %v578, %v593
    %s596 = scalar_lea.vmem [#allocation2], 32
    %v597 = vld [vmem:[%s596] sm:$0xff]
    %599 = vrot.lane.b32.xlu0 %v595, 64
    %v600 = vpop.permute.xlu0 %599
    %v601 = vsel %vm187, %v600, 0
    %603 = vmatprep.subr.mxu0 0.0
    %604 = vmatpush1.msra.mxu0 %v179
    %605 = vmatprep.subr.mxu0 0.0
    %606 = vmatpush1.msra.mxu0 %v180
    %607 = vmatprep.subr.mxu0 0.0
    %608 = vmatpush1.msra.mxu0 %v181
    %609 = vmatprep.subr.mxu0 0.0
    %610 = vmatpush1.msra.mxu0 %v182
    %611 = vmatprep.subr.mxu0 0.0
    %612 = vmatpush1.msra.mxu0 0.0
    %613 = vmatprep.subr.mxu0 0.0
    %614 = vmatpush1.msra.mxu0 0.0
    %615 = vmatprep.subr.mxu0 0.0
    %616 = vmatpush1.msra.mxu0 0.0
    %617 = vmatprep.subr.mxu0 0.0
    %618 = vmatpush1.msra.mxu0 0.0
    %619 = vmatprep.subr.mxu0 0.0
    %620 = vmatpush1.msra.mxu0 0.0
    %621 = vmatprep.subr.mxu0 0.0
    %622 = vmatpush1.msra.mxu0 0.0
    %623 = vmatprep.subr.mxu0 0.0
    %624 = vmatpush1.msra.mxu0 0.0
    %625 = vmatprep.subr.mxu0 0.0
    %626 = vmatpush1.msra.mxu0 0.0
    %627 = vmatprep.subr.mxu0 0.0
    %628 = vmatpush1.msra.mxu0 0.0
    %629 = vmatprep.subr.mxu0 0.0
    %630 = vmatpush1.msra.mxu0 0.0
    %631 = vmatprep.subr.mxu0 0.0
    %632 = vmatpush1.msra.mxu0 0.0
    %633 = vmatprep.subr.mxu0 0.0
    %634 = vmatpush1.msra.mxu0 0.0
    %635 = vmatprep.subr.mxu0 0.0
    %636 = vmatpush1.msra.mxu0 0.0
    %637 = vmatprep.subr.mxu0 0.0
    %638 = vmatpush1.msra.mxu0 0.0
    %639 = vmatprep.subr.mxu0 0.0
    %640 = vmatpush1.msra.mxu0 0.0
    %641 = vmatprep.subr.mxu0 0.0
    %642 = vmatpush1.msra.mxu0 0.0
    %643 = vmatprep.subr.mxu0 0.0
    %644 = vmatpush1.msra.mxu0 0.0
    %645 = vmatprep.subr.mxu0 0.0
    %646 = vmatpush1.msra.mxu0 0.0
    %647 = vmatprep.subr.mxu0 0.0
    %648 = vmatpush1.msra.mxu0 0.0
    %649 = vmatprep.subr.mxu0 0.0
    %650 = vmatpush1.msra.mxu0 0.0
    %651 = vmatprep.subr.mxu0 0.0
    %652 = vmatpush1.msra.mxu0 0.0
    %653 = vmatprep.subr.mxu0 0.0
    %654 = vmatpush1.msra.mxu0 0.0
    %655 = vmatprep.subr.mxu0 0.0
    %656 = vmatpush1.msra.mxu0 0.0
    %657 = vmatprep.subr.mxu0 0.0
    %658 = vmatpush1.msra.mxu0 0.0
    %659 = vmatprep.subr.mxu0 0.0
    %660 = vmatpush1.msra.mxu0 0.0
    %661 = vmatprep.subr.mxu0 0.0
    %662 = vmatpush1.msra.mxu0 0.0
    %663 = vmatprep.subr.mxu0 0.0
    %664 = vmatpush1.msra.mxu0 0.0
    %665 = vmatprep.subr.mxu0 0.0
    %666 = vmatpush1.msra.mxu0 0.0
    %667 = vmatprep.mubr.f32.mxu0 0.0
    %668 = vmatmul.mubr.f32.gmra.mrb[0].mxu0 %v601
    %v669 = vpop.f32.mrb[0].mxu0
    %v670 = vadd.f32 0.0, %v669
    %v671 = vpop.f32.mrb[0].mxu0
    %672 = vdwg.mxu0
    %v673 = vadd.f32 %v597, %v670
    %v674 = vtanh.pop %v673
    %v675 = vxor.u32 %v673, 2147483648
    %v676 = vmul.f32 %v675, 1.442695
    %v677 = vpow.pop %v676
    %v678 = vadd.f32 %v677, 1.0
    %v679 = vrcp.pop %v678
    %v680 = vmul.f32 1.0, %v679
    %v681 = vsel %vm185, %v674, %v680
    %v682 = vmul.f32 %v681, %v589
    %684 = vrot.lane.b32.xlu0 %v681, 32
    %v685 = vpop.permute.xlu0 %684
    %v687 = vmul.f32 %v681, %v685
    %689 = vrot.lane.b32.xlu0 %v687, 32
    %v690 = vpop.permute.xlu0 %689
    %v692 = vadd.f32 %v682, %v690
    %v693 = vtanh.pop %v692
    %695 = vrot.lane.b32.xlu0 %v693, 32
    %v696 = vpop.permute.xlu0 %695
    %v698 = vmul.f32 %v681, %v696
    %s699 = scalar_lea.vmem [#allocation2], 40
    %v700 = vld [vmem:[%s699] sm:$0xff]
    %702 = vrot.lane.b32.xlu0 %v698, 64
    %v703 = vpop.permute.xlu0 %702
    %v704 = vsel %vm187, %v703, 0
    %706 = vmatprep.subr.mxu0 0.0
    %707 = vmatpush1.msra.mxu0 %v179
    %708 = vmatprep.subr.mxu0 0.0
    %709 = vmatpush1.msra.mxu0 %v180
    %710 = vmatprep.subr.mxu0 0.0
    %711 = vmatpush1.msra.mxu0 %v181
    %712 = vmatprep.subr.mxu0 0.0
    %713 = vmatpush1.msra.mxu0 %v182
    %714 = vmatprep.subr.mxu0 0.0
    %715 = vmatpush1.msra.mxu0 0.0
    %716 = vmatprep.subr.mxu0 0.0
    %717 = vmatpush1.msra.mxu0 0.0
    %718 = vmatprep.subr.mxu0 0.0
    %719 = vmatpush1.msra.mxu0 0.0
    %720 = vmatprep.subr.mxu0 0.0
    %721 = vmatpush1.msra.mxu0 0.0
    %722 = vmatprep.subr.mxu0 0.0
    %723 = vmatpush1.msra.mxu0 0.0
    %724 = vmatprep.subr.mxu0 0.0
    %725 = vmatpush1.msra.mxu0 0.0
    %726 = vmatprep.subr.mxu0 0.0
    %727 = vmatpush1.msra.mxu0 0.0
    %728 = vmatprep.subr.mxu0 0.0
    %729 = vmatpush1.msra.mxu0 0.0
    %730 = vmatprep.subr.mxu0 0.0
    %731 = vmatpush1.msra.mxu0 0.0
    %732 = vmatprep.subr.mxu0 0.0
    %733 = vmatpush1.msra.mxu0 0.0
    %734 = vmatprep.subr.mxu0 0.0
    %735 = vmatpush1.msra.mxu0 0.0
    %736 = vmatprep.subr.mxu0 0.0
    %737 = vmatpush1.msra.mxu0 0.0
    %738 = vmatprep.subr.mxu0 0.0
    %739 = vmatpush1.msra.mxu0 0.0
    %740 = vmatprep.subr.mxu0 0.0
    %741 = vmatpush1.msra.mxu0 0.0
    %742 = vmatprep.subr.mxu0 0.0
    %743 = vmatpush1.msra.mxu0 0.0
    %744 = vmatprep.subr.mxu0 0.0
    %745 = vmatpush1.msra.mxu0 0.0
    %746 = vmatprep.subr.mxu0 0.0
    %747 = vmatpush1.msra.mxu0 0.0
    %748 = vmatprep.subr.mxu0 0.0
    %749 = vmatpush1.msra.mxu0 0.0
    %750 = vmatprep.subr.mxu0 0.0
    %751 = vmatpush1.msra.mxu0 0.0
    %752 = vmatprep.subr.mxu0 0.0
    %753 = vmatpush1.msra.mxu0 0.0
    %754 = vmatprep.subr.mxu0 0.0
    %755 = vmatpush1.msra.mxu0 0.0
    %756 = vmatprep.subr.mxu0 0.0
    %757 = vmatpush1.msra.mxu0 0.0
    %758 = vmatprep.subr.mxu0 0.0
    %759 = vmatpush1.msra.mxu0 0.0
    %760 = vmatprep.subr.mxu0 0.0
    %761 = vmatpush1.msra.mxu0 0.0
    %762 = vmatprep.subr.mxu0 0.0
    %763 = vmatpush1.msra.mxu0 0.0
    %764 = vmatprep.subr.mxu0 0.0
    %765 = vmatpush1.msra.mxu0 0.0
    %766 = vmatprep.subr.mxu0 0.0
    %767 = vmatpush1.msra.mxu0 0.0
    %768 = vmatprep.subr.mxu0 0.0
    %769 = vmatpush1.msra.mxu0 0.0
    %770 = vmatprep.mubr.f32.mxu0 0.0
    %771 = vmatmul.mubr.f32.gmra.mrb[0].mxu0 %v704
    %v772 = vpop.f32.mrb[0].mxu0
    %v773 = vadd.f32 0.0, %v772
    %v774 = vpop.f32.mrb[0].mxu0
    %775 = vdwg.mxu0
    %v776 = vadd.f32 %v700, %v773
    %v777 = vtanh.pop %v776
    %v778 = vxor.u32 %v776, 2147483648
    %v779 = vmul.f32 %v778, 1.442695
    %v780 = vpow.pop %v779
    %v781 = vadd.f32 %v780, 1.0
    %v782 = vrcp.pop %v781
    %v783 = vmul.f32 1.0, %v782
    %v784 = vsel %vm185, %v777, %v783
    %v785 = vmul.f32 %v784, %v692
    %787 = vrot.lane.b32.xlu0 %v784, 32
    %v788 = vpop.permute.xlu0 %787
    %v790 = vmul.f32 %v784, %v788
    %792 = vrot.lane.b32.xlu0 %v790, 32
    %v793 = vpop.permute.xlu0 %792
    %v795 = vadd.f32 %v785, %v793
    %v796 = vtanh.pop %v795
    %798 = vrot.lane.b32.xlu0 %v796, 32
    %v799 = vpop.permute.xlu0 %798
    %v801 = vmul.f32 %v784, %v799
    %s802 = scalar_lea.vmem [#allocation2], 48
    %v803 = vld [vmem:[%s802] sm:$0xff]
    %805 = vrot.lane.b32.xlu0 %v801, 64
    %v806 = vpop.permute.xlu0 %805
    %v807 = vsel %vm187, %v806, 0
    %809 = vmatprep.subr.mxu0 0.0
    %810 = vmatpush1.msra.mxu0 %v179
    %811 = vmatprep.subr.mxu0 0.0
    %812 = vmatpush1.msra.mxu0 %v180
    %813 = vmatprep.subr.mxu0 0.0
    %814 = vmatpush1.msra.mxu0 %v181
    %815 = vmatprep.subr.mxu0 0.0
    %816 = vmatpush1.msra.mxu0 %v182
    %817 = vmatprep.subr.mxu0 0.0
    %818 = vmatpush1.msra.mxu0 0.0
    %819 = vmatprep.subr.mxu0 0.0
    %820 = vmatpush1.msra.mxu0 0.0
    %821 = vmatprep.subr.mxu0 0.0
    %822 = vmatpush1.msra.mxu0 0.0
    %823 = vmatprep.subr.mxu0 0.0
    %824 = vmatpush1.msra.mxu0 0.0
    %825 = vmatprep.subr.mxu0 0.0
    %826 = vmatpush1.msra.mxu0 0.0
    %827 = vmatprep.subr.mxu0 0.0
    %828 = vmatpush1.msra.mxu0 0.0
    %829 = vmatprep.subr.mxu0 0.0
    %830 = vmatpush1.msra.mxu0 0.0
    %831 = vmatprep.subr.mxu0 0.0
    %832 = vmatpush1.msra.mxu0 0.0
    %833 = vmatprep.subr.mxu0 0.0
    %834 = vmatpush1.msra.mxu0 0.0
    %835 = vmatprep.subr.mxu0 0.0
    %836 = vmatpush1.msra.mxu0 0.0
    %837 = vmatprep.subr.mxu0 0.0
    %838 = vmatpush1.msra.mxu0 0.0
    %839 = vmatprep.subr.mxu0 0.0
    %840 = vmatpush1.msra.mxu0 0.0
    %841 = vmatprep.subr.mxu0 0.0
    %842 = vmatpush1.msra.mxu0 0.0
    %843 = vmatprep.subr.mxu0 0.0
    %844 = vmatpush1.msra.mxu0 0.0
    %845 = vmatprep.subr.mxu0 0.0
    %846 = vmatpush1.msra.mxu0 0.0
    %847 = vmatprep.subr.mxu0 0.0
    %848 = vmatpush1.msra.mxu0 0.0
    %849 = vmatprep.subr.mxu0 0.0
    %850 = vmatpush1.msra.mxu0 0.0
    %851 = vmatprep.subr.mxu0 0.0
    %852 = vmatpush1.msra.mxu0 0.0
    %853 = vmatprep.subr.mxu0 0.0
    %854 = vmatpush1.msra.mxu0 0.0
    %855 = vmatprep.subr.mxu0 0.0
    %856 = vmatpush1.msra.mxu0 0.0
    %857 = vmatprep.subr.mxu0 0.0
    %858 = vmatpush1.msra.mxu0 0.0
    %859 = vmatprep.subr.mxu0 0.0
    %860 = vmatpush1.msra.mxu0 0.0
    %861 = vmatprep.subr.mxu0 0.0
    %862 = vmatpush1.msra.mxu0 0.0
    %863 = vmatprep.subr.mxu0 0.0
    %864 = vmatpush1.msra.mxu0 0.0
    %865 = vmatprep.subr.mxu0 0.0
    %866 = vmatpush1.msra.mxu0 0.0
    %867 = vmatprep.subr.mxu0 0.0
    %868 = vmatpush1.msra.mxu0 0.0
    %869 = vmatprep.subr.mxu0 0.0
    %870 = vmatpush1.msra.mxu0 0.0
    %871 = vmatprep.subr.mxu0 0.0
    %872 = vmatpush1.msra.mxu0 0.0
    %873 = vmatprep.mubr.f32.mxu0 0.0
    %874 = vmatmul.mubr.f32.gmra.mrb[0].mxu0 %v807
    %v875 = vpop.f32.mrb[0].mxu0
    %v876 = vadd.f32 0.0, %v875
    %v877 = vpop.f32.mrb[0].mxu0
    %878 = vdwg.mxu0
    %v879 = vadd.f32 %v803, %v876
    %v880 = vtanh.pop %v879
    %v881 = vxor.u32 %v879, 2147483648
    %v882 = vmul.f32 %v881, 1.442695
    %v883 = vpow.pop %v882
    %v884 = vadd.f32 %v883, 1.0
    %v885 = vrcp.pop %v884
    %v886 = vmul.f32 1.0, %v885
    %v887 = vsel %vm185, %v880, %v886
    %v888 = vmul.f32 %v887, %v795
    %890 = vrot.lane.b32.xlu0 %v887, 32
    %v891 = vpop.permute.xlu0 %890
    %v893 = vmul.f32 %v887, %v891
    %895 = vrot.lane.b32.xlu0 %v893, 32
    %v896 = vpop.permute.xlu0 %895
    %v898 = vadd.f32 %v888, %v896
    %v899 = vtanh.pop %v898
    %901 = vrot.lane.b32.xlu0 %v899, 32
    %v902 = vpop.permute.xlu0 %901
    %v904 = vmul.f32 %v887, %v902
    %s905 = scalar_lea.vmem [#allocation2], 56
    %v906 = vld [vmem:[%s905] sm:$0xff]
    %908 = vrot.lane.b32.xlu0 %v904, 64
    %v909 = vpop.permute.xlu0 %908
    %v910 = vsel %vm187, %v909, 0
    %912 = vmatprep.subr.mxu0 0.0
    %913 = vmatpush1.msra.mxu0 %v179
    %914 = vmatprep.subr.mxu0 0.0
    %915 = vmatpush1.msra.mxu0 %v180
    %916 = vmatprep.subr.mxu0 0.0
    %917 = vmatpush1.msra.mxu0 %v181
    %918 = vmatprep.subr.mxu0 0.0
    %919 = vmatpush1.msra.mxu0 %v182
    %920 = vmatprep.subr.mxu0 0.0
    %921 = vmatpush1.msra.mxu0 0.0
    %922 = vmatprep.subr.mxu0 0.0
    %923 = vmatpush1.msra.mxu0 0.0
    %924 = vmatprep.subr.mxu0 0.0
    %925 = vmatpush1.msra.mxu0 0.0
    %926 = vmatprep.subr.mxu0 0.0
    %927 = vmatpush1.msra.mxu0 0.0
    %928 = vmatprep.subr.mxu0 0.0
    %929 = vmatpush1.msra.mxu0 0.0
    %930 = vmatprep.subr.mxu0 0.0
    %931 = vmatpush1.msra.mxu0 0.0
    %932 = vmatprep.subr.mxu0 0.0
    %933 = vmatpush1.msra.mxu0 0.0
    %934 = vmatprep.subr.mxu0 0.0
    %935 = vmatpush1.msra.mxu0 0.0
    %936 = vmatprep.subr.mxu0 0.0
    %937 = vmatpush1.msra.mxu0 0.0
    %938 = vmatprep.subr.mxu0 0.0
    %939 = vmatpush1.msra.mxu0 0.0
    %940 = vmatprep.subr.mxu0 0.0
    %941 = vmatpush1.msra.mxu0 0.0
    %942 = vmatprep.subr.mxu0 0.0
    %943 = vmatpush1.msra.mxu0 0.0
    %944 = vmatprep.subr.mxu0 0.0
    %945 = vmatpush1.msra.mxu0 0.0
    %946 = vmatprep.subr.mxu0 0.0
    %947 = vmatpush1.msra.mxu0 0.0
    %948 = vmatprep.subr.mxu0 0.0
    %949 = vmatpush1.msra.mxu0 0.0
    %950 = vmatprep.subr.mxu0 0.0
    %951 = vmatpush1.msra.mxu0 0.0
    %952 = vmatprep.subr.mxu0 0.0
    %953 = vmatpush1.msra.mxu0 0.0
    %954 = vmatprep.subr.mxu0 0.0
    %955 = vmatpush1.msra.mxu0 0.0
    %956 = vmatprep.subr.mxu0 0.0
    %957 = vmatpush1.msra.mxu0 0.0
    %958 = vmatprep.subr.mxu0 0.0
    %959 = vmatpush1.msra.mxu0 0.0
    %960 = vmatprep.subr.mxu0 0.0
    %961 = vmatpush1.msra.mxu0 0.0
    %962 = vmatprep.subr.mxu0 0.0
    %963 = vmatpush1.msra.mxu0 0.0
    %964 = vmatprep.subr.mxu0 0.0
    %965 = vmatpush1.msra.mxu0 0.0
    %966 = vmatprep.subr.mxu0 0.0
    %967 = vmatpush1.msra.mxu0 0.0
    %968 = vmatprep.subr.mxu0 0.0
    %969 = vmatpush1.msra.mxu0 0.0
    %970 = vmatprep.subr.mxu0 0.0
    %971 = vmatpush1.msra.mxu0 0.0
    %972 = vmatprep.subr.mxu0 0.0
    %973 = vmatpush1.msra.mxu0 0.0
    %974 = vmatprep.subr.mxu0 0.0
    %975 = vmatpush1.msra.mxu0 0.0
    %976 = vmatprep.mubr.f32.mxu0 0.0
    %977 = vmatmul.mubr.f32.gmra.mrb[0].mxu0 %v910
    %v978 = vpop.f32.mrb[0].mxu0
    %v979 = vadd.f32 0.0, %v978
    %v980 = vpop.f32.mrb[0].mxu0
    %981 = vdwg.mxu0
    %v982 = vadd.f32 %v906, %v979
    %v983 = vtanh.pop %v982
    %v984 = vxor.u32 %v982, 2147483648
    %v985 = vmul.f32 %v984, 1.442695
    %v986 = vpow.pop %v985
    %v987 = vadd.f32 %v986, 1.0
    %v988 = vrcp.pop %v987
    %v989 = vmul.f32 1.0, %v988
    %v990 = vsel %vm185, %v983, %v989
    %v991 = vmul.f32 %v990, %v898
    %993 = vrot.lane.b32.xlu0 %v990, 32
    %v994 = vpop.permute.xlu0 %993
    %v996 = vmul.f32 %v990, %v994
    %998 = vrot.lane.b32.xlu0 %v996, 32
    %v999 = vpop.permute.xlu0 %998
    %v1001 = vadd.f32 %v991, %v999
    %v1002 = vtanh.pop %v1001
    %1004 = vrot.lane.b32.xlu0 %v1002, 32
    %v1005 = vpop.permute.xlu0 %1004
    %v1007 = vmul.f32 %v990, %v1005
    %v1008 = vld [vmem:[%s4] sm:$0xff]
    %v1009 = vld [vmem:[%s4 + $0x8] sm:$0xff]
    %v1010 = vld [vmem:[%s4 + $0x10] sm:$0xff]
    %v1011 = vld [vmem:[%s4 + $0x18] sm:$0xff]
    %v1012 = vld [vmem:[%s5] sm:$0x1]
    %v1014 = vlaneseq
    %v1015 = vshrl.u32 %v1014, 7
    %v1016 = vsub.s32 0, %v1015
    %v1017 = vrot.slane %v1012, %v1016
    %1020 = vrot.lane.b32.xlu0 %v1007, 64
    %v1021 = vpop.permute.xlu0 %1020
    %v1022 = vsel %vm187, %v1021, 0
    %1024 = vmatprep.subr.mxu0 0.0
    %1025 = vmatpush1.msra.mxu0 %v1008
    %1026 = vmatprep.subr.mxu0 0.0
    %1027 = vmatpush1.msra.mxu0 %v1009
    %1028 = vmatprep.subr.mxu0 0.0
    %1029 = vmatpush1.msra.mxu0 %v1010
    %1030 = vmatprep.subr.mxu0 0.0
    %1031 = vmatpush1.msra.mxu0 %v1011
    %1032 = vmatprep.subr.mxu0 0.0
    %1033 = vmatpush1.msra.mxu0 0.0
    %1034 = vmatprep.subr.mxu0 0.0
    %1035 = vmatpush1.msra.mxu0 0.0
    %1036 = vmatprep.subr.mxu0 0.0
    %1037 = vmatpush1.msra.mxu0 0.0
    %1038 = vmatprep.subr.mxu0 0.0
    %1039 = vmatpush1.msra.mxu0 0.0
    %1040 = vmatprep.subr.mxu0 0.0
    %1041 = vmatpush1.msra.mxu0 0.0
    %1042 = vmatprep.subr.mxu0 0.0
    %1043 = vmatpush1.msra.mxu0 0.0
    %1044 = vmatprep.subr.mxu0 0.0
    %1045 = vmatpush1.msra.mxu0 0.0
    %1046 = vmatprep.subr.mxu0 0.0
    %1047 = vmatpush1.msra.mxu0 0.0
    %1048 = vmatprep.subr.mxu0 0.0
    %1049 = vmatpush1.msra.mxu0 0.0
    %1050 = vmatprep.subr.mxu0 0.0
    %1051 = vmatpush1.msra.mxu0 0.0
    %1052 = vmatprep.subr.mxu0 0.0
    %1053 = vmatpush1.msra.mxu0 0.0
    %1054 = vmatprep.subr.mxu0 0.0
    %1055 = vmatpush1.msra.mxu0 0.0
    %1056 = vmatprep.subr.mxu0 0.0
    %1057 = vmatpush1.msra.mxu0 0.0
    %1058 = vmatprep.subr.mxu0 0.0
    %1059 = vmatpush1.msra.mxu0 0.0
    %1060 = vmatprep.subr.mxu0 0.0
    %1061 = vmatpush1.msra.mxu0 0.0
    %1062 = vmatprep.subr.mxu0 0.0
    %1063 = vmatpush1.msra.mxu0 0.0
    %1064 = vmatprep.subr.mxu0 0.0
    %1065 = vmatpush1.msra.mxu0 0.0
    %1066 = vmatprep.subr.mxu0 0.0
    %1067 = vmatpush1.msra.mxu0 0.0
    %1068 = vmatprep.subr.mxu0 0.0
    %1069 = vmatpush1.msra.mxu0 0.0
    %1070 = vmatprep.subr.mxu0 0.0
    %1071 = vmatpush1.msra.mxu0 0.0
    %1072 = vmatprep.subr.mxu0 0.0
    %1073 = vmatpush1.msra.mxu0 0.0
    %1074 = vmatprep.subr.mxu0 0.0
    %1075 = vmatpush1.msra.mxu0 0.0
    %1076 = vmatprep.subr.mxu0 0.0
    %1077 = vmatpush1.msra.mxu0 0.0
    %1078 = vmatprep.subr.mxu0 0.0
    %1079 = vmatpush1.msra.mxu0 0.0
    %1080 = vmatprep.subr.mxu0 0.0
    %1081 = vmatpush1.msra.mxu0 0.0
    %1082 = vmatprep.subr.mxu0 0.0
    %1083 = vmatpush1.msra.mxu0 0.0
    %1084 = vmatprep.subr.mxu0 0.0
    %1085 = vmatpush1.msra.mxu0 0.0
    %1086 = vmatprep.subr.mxu0 0.0
    %1087 = vmatpush1.msra.mxu0 0.0
    %1088 = vmatprep.mubr.f32.mxu0 0.0
    %1089 = vmatmul.mubr.f32.gmra.mrb[0].mxu0 %v1022
    %v1090 = vpop.f32.mrb[0].mxu0
    %v1091 = vadd.f32 %v1017, %v1090
    %v1092 = vpop.f32.mrb[0].mxu0
    %1093 = vdwg.mxu0
    %1094 = vmax.xlane.f32.xlu0 %v1091
    %v1095 = vpop.xlane.xlu0 %1094
    %v1096 = vsub.f32 %v1091, %v1095
    %v1097 = vmul.f32 %v1096, 1.442695
    %v1098 = vpow.pop %v1097
    %1099 = vadd.xlane.f32.xlu0 %v1098
    %v1100 = vpop.xlane.xlu0 %1099
    %v1101 = vlog2.pop %v1100
    %v1102 = vmul.f32 %v1101, 0.6931472
    %v1103 = vadd.f32 %v1102, %v1095
    %v1104 = vsub.f32 %v1091, %v1103
    %1105 = vst [vmem:[#allocation3] sm:$0xff] %v1104
    // Predicated region
    $region26: #{tpu_custom_call.1} parent=1 // pred_check
      _
    $region27: #{tpu_custom_call.1} parent=1 // pred_check_branch
      %1107 = sbr.rel (0) target = $region29
    $region28: #{tpu_custom_call.1} parent=1 // pred_region
      %s1109 = ssub.s32 128, 128
      %1110 = vsyncadd [#allocation4], %s1109
      %s1112 = sshll.u32 [#allocation3], 4
      %s1113 = int_to_ptr.vmem [resolvable:$true] %s1112
      %1115 = dma.vmem_to_hbm [thread:$0]  %s1113, 128, %s6, [#allocation4]
    $region29: #{tpu_custom_call.1} parent=1 // pred_fallthru
      _
    // Predicated region
    $region30: #{tpu_custom_call.1} parent=1 // pred_check
      _
    $region31: #{tpu_custom_call.1} parent=1 // pred_check_branch
      %1117 = sbr.rel (0) target = $region33
    $region32: #{tpu_custom_call.1} parent=1 // pred_region
      %1118 = dma.done [#allocation4], 128
    $region33: #{tpu_custom_call.1} parent=1 // pred_fallthru
      _
    %1119 = vsyncpa [#allocation4], 1

</llo_original>
